<compile_context>
chip_gen: v7x
topology: tpu7x:2x2x1
jax: 0.10.0
libtpu: 0.0.40
codegen_flags: <defaults>
</compile_context>

<pallas_src>
import functools

import jax
import jax.numpy as jnp
from jax.experimental import pallas as pl
from jax.experimental.pallas import tpu as pltpu


def _round_up(a, b):
    return (a + b - 1) // b * b


def _prenorm_residual_kernel(x_ref, g_ref, b_ref, w1_ref, b1_ref, w2_ref, b2_ref,
                             o_ref, *, eps):
    # x_ref: (tm, D) tile of tokens.
    x = x_ref[...].astype(jnp.float32)

    # Read the small resident params once (hoisted, f32).
    g = g_ref[...].astype(jnp.float32)        # (1, D)
    b = b_ref[...].astype(jnp.float32)        # (1, D)
    b1 = b1_ref[...].astype(jnp.float32)      # (1, H)
    b2 = b2_ref[...].astype(jnp.float32)      # (1, D)

    # ---- LayerNorm over last dim (f32 statistics on the VPU) ----
    mu = jnp.mean(x, axis=-1, keepdims=True)
    xc = x - mu
    var = jnp.mean(xc * xc, axis=-1, keepdims=True)
    xn = (xc * jax.lax.rsqrt(var + eps)) * g + b

    # ---- fn: Linear -> GELU -> Linear ----
    # bf16 operands on the MXU, f32 accumulation.
    h = jnp.dot(xn.astype(w1_ref.dtype), w1_ref[...],
                preferred_element_type=jnp.float32) + b1
    # TODO(synk): PyTorch nn.GELU defaults to exact erf; tanh-approx GELU is
    # used here (~1e-3 difference). Switch to approximate=False if erf lowering
    # / bit-closeness to PyTorch is required.
    h = jax.nn.gelu(h, approximate=True)
    y = jnp.dot(h.astype(w2_ref.dtype), w2_ref[...],
                preferred_element_type=jnp.float32) + b2

    # ---- residual (f32) ----
    o_ref[...] = (y + x).astype(o_ref.dtype)


def _vmem_bytes_estimate(tm, D, H, x_itemsize, out_itemsize, w_itemsize):
    """Rough per-core VMEM footprint for a given row tile."""
    # Double-buffered pipelined x / out tiles.
    tiles = 2 * tm * D * x_itemsize + 2 * tm * D * out_itemsize
    # Resident weights (conservatively assume they are allocated double-width)
    # plus (padded) biases / LN params.
    weights = 2 * (D * H + H * D) * w_itemsize + 4 * (2 * D + H) * 4 + 64 * 1024
    # Live in-kernel intermediates: x/xn/y in f32 plus h in f32 + bf16.
    live = tm * (3 * D * 4 + H * (4 + w_itemsize))
    return tiles + weights + live


def prenorm_residual(x, gamma, beta, w1, b1, w2, b2, *, eps=1e-5, tm_max=1024,
                     matmul_dtype=jnp.bfloat16, num_cores=None,
                     vmem_budget_bytes=32 * 1024 * 1024):
    B, N, D = x.shape
    H = w1.shape[1]
    M = B * N
    out_dtype = x.dtype

    if num_cores is None:
        # Number of TensorCores the 'parallel' row axis can shard across
        # (2 on v7x, 1 on v5e/v6e).  Fall back to 1 if unknown.
        try:
            num_cores = int(getattr(jax.devices()[0], "num_cores", 1)) or 1
        except Exception:  # pragma: no cover - defensive
            num_cores = 1

    # --- row-tile selection ---
    # As large as possible (amortize ~0.35us/step pipeline overhead, keep the
    # MXU fed), multiple of 8 sublanes, chosen so the last partial block wastes
    # as little as possible.  No wrapper-side padding: grid = cdiv(M, tm) and
    # Pallas handles the partial last block (per-row math => pad rows inert).
    num_tiles = max(1, pl.cdiv(M, tm_max))
    if num_cores > 1:
        num_tiles = _round_up(num_tiles, num_cores)   # balance the two v7x TCs
    tm = max(8, _round_up(pl.cdiv(M, num_tiles), 8))

    # Cap tm against the VMEM budget (re-derived per generation: 32 MiB default
    # leaves ample headroom even on v7x's 64 MiB physical VMEM per core).
    while tm > 8 and _vmem_bytes_estimate(
            tm, D, H, x.dtype.itemsize, jnp.dtype(out_dtype).itemsize,
            jnp.dtype(matmul_dtype).itemsize) > vmem_budget_bytes:
        tm = max(8, _round_up(tm // 2, 8))

    grid_m = pl.cdiv(M, tm)

    x2 = x.reshape(M, D)          # view-like reshape; no extra HBM pass

    # bf16 MXU operands (weights cast once here -> half the weight DMA/VMEM).
    w1c = w1.astype(matmul_dtype)
    w2c = w2.astype(matmul_dtype)
    gamma2 = gamma.reshape(1, D).astype(jnp.float32)
    beta2 = beta.reshape(1, D).astype(jnp.float32)
    b1_2 = b1.reshape(1, H).astype(jnp.float32)
    b2_2 = b2.reshape(1, D).astype(jnp.float32)

    # Scoped-VMEM request: actual requirement + margin, never the full 64 MiB
    # of a v7x TensorCore.
    est = _vmem_bytes_estimate(tm, D, H, x.dtype.itemsize,
                               jnp.dtype(out_dtype).itemsize,
                               jnp.dtype(matmul_dtype).itemsize)
    vmem_limit_bytes = int(min(max(est * 5 // 4 + (4 << 20), 16 << 20), 48 << 20))

    # Advisory cost estimate so XLA schedules the producer of x / consumers of
    # out around this custom call correctly.
    cost = pl.CostEstimate(
        flops=4 * M * D * H,                      # two (M,D)x(D,H)-class matmuls
        transcendentals=M * H,                    # tanh in GELU
        bytes_accessed=(M * D * (x.dtype.itemsize + jnp.dtype(out_dtype).itemsize)
                        + 2 * D * H * jnp.dtype(matmul_dtype).itemsize
                        + (2 * D + H + D) * 4),
    )

    out = pl.pallas_call(
        functools.partial(_prenorm_residual_kernel, eps=eps),
        out_shape=jax.ShapeDtypeStruct((M, D), out_dtype),
        grid_spec=pltpu.PrefetchScalarGridSpec(
            num_scalar_prefetch=0,
            grid=(grid_m,),
            in_specs=[
                pl.BlockSpec((tm, D), lambda i: (i, 0)),   # x tile (pipelined)
                # Constant-index blocks: DMA'd once, resident across the grid.
                pl.BlockSpec((1, D), lambda i: (0, 0)),    # gamma
                pl.BlockSpec((1, D), lambda i: (0, 0)),    # beta
                pl.BlockSpec((D, H), lambda i: (0, 0)),    # w1 (bf16)
                pl.BlockSpec((1, H), lambda i: (0, 0)),    # b1
                pl.BlockSpec((H, D), lambda i: (0, 0)),    # w2 (bf16)
                pl.BlockSpec((1, D), lambda i: (0, 0)),    # b2
            ],
            out_specs=pl.BlockSpec((tm, D), lambda i: (i, 0)),
        ),
        compiler_params=pltpu.CompilerParams(
            dimension_semantics=("parallel",),
            vmem_limit_bytes=vmem_limit_bytes,
        ),
        cost_estimate=cost,
    )(x2, gamma2, beta2, w1c, b1_2, w2c, b2_2)

    return out.reshape(B, N, D)


def reference(x, gamma, beta, w1, b1, w2, b2, eps=1e-5,
              matmul_dtype=jnp.bfloat16):
    """Pure-JAX reference mirroring the kernel's precision policy."""
    xf = x.astype(jnp.float32)
    mu = jnp.mean(xf, axis=-1, keepdims=True)
    var = jnp.mean((xf - mu) ** 2, axis=-1, keepdims=True)
    xn = (xf - mu) * jax.lax.rsqrt(var + eps) * gamma + beta
    h = jnp.dot(xn.astype(matmul_dtype), w1.astype(matmul_dtype),
                preferred_element_type=jnp.float32) + b1
    h = jax.nn.gelu(h, approximate=True)
    y = jnp.dot(h.astype(matmul_dtype), w2.astype(matmul_dtype),
                preferred_element_type=jnp.float32) + b2
    return (y + xf).astype(x.dtype)


if __name__ == "__main__":
    key = jax.random.PRNGKey(0)
    # batch, seq, dim (lane-dense: multiple of 128), hidden of fn
    B, N, D, H = 2, 16, 128, 256

    k = jax.random.split(key, 7)
    x = jax.random.normal(k[0], (B, N, D), dtype=jnp.float32)
    gamma = jnp.ones((D,), jnp.float32)          # nn.LayerNorm default weight
    beta = jnp.zeros((D,), jnp.float32)          # nn.LayerNorm default bias
    w1 = jax.random.normal(k[1], (D, H), jnp.float32) * 0.05
    b1 = jax.random.normal(k[2], (H,), jnp.float32) * 0.01
    w2 = jax.random.normal(k[3], (H, D), jnp.float32) * 0.05
    b2 = jax.random.normal(k[4], (D,), jnp.float32) * 0.01

    out = prenorm_residual(x, gamma, beta, w1, b1, w2, b2)
    out = jax.block_until_ready(out)

    ref = reference(x, gamma, beta, w1, b1, w2, b2)
    assert out.shape == (B, N, D)
    assert jnp.max(jnp.abs(out - ref)) < 1e-2

    print("KERNEL_OK")
</pallas_src>

<mosaic_0001>
module attributes {stable_mosaic.version = 11 : i64} {
  func.func @_prenorm_residual_kernel(%arg0: i32, %arg1: memref<32x128xf32, #tpu.memory_space<vmem>>, %arg2: memref<1x128xf32, #tpu.memory_space<vmem>>, %arg3: memref<1x128xf32, #tpu.memory_space<vmem>>, %arg4: memref<128x256xbf16, #tpu.memory_space<vmem>>, %arg5: memref<1x256xf32, #tpu.memory_space<vmem>>, %arg6: memref<256x128xbf16, #tpu.memory_space<vmem>>, %arg7: memref<1x128xf32, #tpu.memory_space<vmem>>, %arg8: memref<32x128xf32, #tpu.memory_space<vmem>>) attributes {dimension_semantics = [#tpu.dimension_semantics<parallel>], iteration_bounds = array<i64: 1>, scalar_prefetch = 0 : i64, scratch_operands = 0 : i64, tpu.core_type = #tpu.core_type<tc>, window_params = [{transform_indices = @transform_0, window_bounds = array<i64: 32, 128>}, {pipeline_mode = #tpu.pipeline_mode<synchronous>, transform_indices = @transform_1, window_bounds = array<i64: 1, 128>}, {pipeline_mode = #tpu.pipeline_mode<synchronous>, transform_indices = @transform_2, window_bounds = array<i64: 1, 128>}, {pipeline_mode = #tpu.pipeline_mode<synchronous>, transform_indices = @transform_3, window_bounds = array<i64: 128, 256>}, {pipeline_mode = #tpu.pipeline_mode<synchronous>, transform_indices = @transform_4, window_bounds = array<i64: 1, 256>}, {pipeline_mode = #tpu.pipeline_mode<synchronous>, transform_indices = @transform_5, window_bounds = array<i64: 256, 128>}, {pipeline_mode = #tpu.pipeline_mode<synchronous>, transform_indices = @transform_6, window_bounds = array<i64: 1, 128>}, {transform_indices = @transform_7, window_bounds = array<i64: 32, 128>}]} {
    %c0 = arith.constant 0 : index
    %c0_0 = arith.constant 0 : index
    %0 = vector.load %arg1[%c0, %c0_0] : memref<32x128xf32, #tpu.memory_space<vmem>>, vector<32x128xf32>
    %c0_1 = arith.constant 0 : index
    %c0_2 = arith.constant 0 : index
    %1 = vector.load %arg2[%c0_1, %c0_2] : memref<1x128xf32, #tpu.memory_space<vmem>>, vector<1x128xf32>
    %c0_3 = arith.constant 0 : index
    %c0_4 = arith.constant 0 : index
    %2 = vector.load %arg3[%c0_3, %c0_4] : memref<1x128xf32, #tpu.memory_space<vmem>>, vector<1x128xf32>
    %c0_5 = arith.constant 0 : index
    %c0_6 = arith.constant 0 : index
    %3 = vector.load %arg5[%c0_5, %c0_6] : memref<1x256xf32, #tpu.memory_space<vmem>>, vector<1x256xf32>
    %c0_7 = arith.constant 0 : index
    %c0_8 = arith.constant 0 : index
    %4 = vector.load %arg7[%c0_7, %c0_8] : memref<1x128xf32, #tpu.memory_space<vmem>>, vector<1x128xf32>
    %cst = arith.constant dense<0.000000e+00> : vector<32xf32>
    %5 = vector.multi_reduction <add>, %0, %cst [1] : vector<32x128xf32> to vector<32xf32>
    %6 = vector.shape_cast %5 : vector<32xf32> to vector<32x1xf32>
    %cst_9 = arith.constant 1.280000e+02 : f32
    %7 = vector.broadcast %cst_9 : f32 to vector<32x1xf32>
    %8 = arith.divf %6, %7 : vector<32x1xf32>
    %9 = vector.broadcast %8 : vector<32x1xf32> to vector<32x128xf32>
    %10 = arith.subf %0, %9 : vector<32x128xf32>
    %11 = arith.mulf %10, %10 : vector<32x128xf32>
    %cst_10 = arith.constant dense<0.000000e+00> : vector<32xf32>
    %12 = vector.multi_reduction <add>, %11, %cst_10 [1] : vector<32x128xf32> to vector<32xf32>
    %13 = vector.shape_cast %12 : vector<32xf32> to vector<32x1xf32>
    %cst_11 = arith.constant 1.280000e+02 : f32
    %14 = vector.broadcast %cst_11 : f32 to vector<32x1xf32>
    %15 = arith.divf %13, %14 : vector<32x1xf32>
    %cst_12 = arith.constant 9.99999974E-6 : f32
    %16 = vector.broadcast %cst_12 : f32 to vector<32x1xf32>
    %17 = arith.addf %15, %16 : vector<32x1xf32>
    %18 = math.rsqrt %17 : vector<32x1xf32>
    %19 = vector.broadcast %18 : vector<32x1xf32> to vector<32x128xf32>
    %20 = arith.mulf %10, %19 : vector<32x128xf32>
    %21 = vector.broadcast %1 : vector<1x128xf32> to vector<32x128xf32>
    %22 = arith.mulf %20, %21 : vector<32x128xf32>
    %23 = vector.broadcast %2 : vector<1x128xf32> to vector<32x128xf32>
    %24 = arith.addf %22, %23 : vector<32x128xf32>
    %25 = arith.truncf %24 : vector<32x128xf32> to vector<32x128xbf16>
    %c0_13 = arith.constant 0 : index
    %c0_14 = arith.constant 0 : index
    %26 = vector.load %arg4[%c0_13, %c0_14] : memref<128x256xbf16, #tpu.memory_space<vmem>>, vector<128x256xbf16>
    %cst_15 = arith.constant dense<0.000000e+00> : vector<32x256xf32>
    %27 = tpu.matmul %25, %26, %cst_15 {dimension_numbers = #tpu.dot_dimension_numbers<[1], [0], [0], [1], [0, 0, 1, 1], [], []>} : vector<32x128xbf16>, vector<128x256xbf16>, vector<32x256xf32> -> vector<32x256xf32>
    %28 = vector.broadcast %3 : vector<1x256xf32> to vector<32x256xf32>
    %29 = arith.addf %27, %28 : vector<32x256xf32>
    %30 = arith.mulf %29, %29 : vector<32x256xf32>
    %31 = arith.mulf %29, %30 : vector<32x256xf32>
    %cst_16 = arith.constant 4.471500e-02 : f32
    %32 = vector.broadcast %cst_16 : f32 to vector<32x256xf32>
    %33 = arith.mulf %32, %31 : vector<32x256xf32>
    %34 = arith.addf %29, %33 : vector<32x256xf32>
    %cst_17 = arith.constant 0.797884583 : f32
    %35 = vector.broadcast %cst_17 : f32 to vector<32x256xf32>
    %36 = arith.mulf %35, %34 : vector<32x256xf32>
    %37 = math.tanh %36 : vector<32x256xf32>
    %cst_18 = arith.constant 1.000000e+00 : f32
    %38 = vector.broadcast %cst_18 : f32 to vector<32x256xf32>
    %39 = arith.addf %38, %37 : vector<32x256xf32>
    %cst_19 = arith.constant 5.000000e-01 : f32
    %40 = vector.broadcast %cst_19 : f32 to vector<32x256xf32>
    %41 = arith.mulf %40, %39 : vector<32x256xf32>
    %42 = arith.mulf %29, %41 : vector<32x256xf32>
    %43 = arith.truncf %42 : vector<32x256xf32> to vector<32x256xbf16>
    %c0_20 = arith.constant 0 : index
    %c0_21 = arith.constant 0 : index
    %44 = vector.load %arg6[%c0_20, %c0_21] : memref<256x128xbf16, #tpu.memory_space<vmem>>, vector<256x128xbf16>
    %cst_22 = arith.constant dense<0.000000e+00> : vector<32x128xf32>
    %45 = tpu.matmul %43, %44, %cst_22 {dimension_numbers = #tpu.dot_dimension_numbers<[1], [0], [0], [1], [0, 0, 1, 1], [], []>} : vector<32x256xbf16>, vector<256x128xbf16>, vector<32x128xf32> -> vector<32x128xf32>
    %46 = vector.broadcast %4 : vector<1x128xf32> to vector<32x128xf32>
    %47 = arith.addf %45, %46 : vector<32x128xf32>
    %48 = arith.addf %47, %0 : vector<32x128xf32>
    %c0_23 = arith.constant 0 : index
    %c0_24 = arith.constant 0 : index
    %49 = vector.load %arg8[%c0_23, %c0_24] : memref<32x128xf32, #tpu.memory_space<vmem>>, vector<32x128xf32>
    tpu.vector_store %arg8[%c0_23, %c0_24], %48 {strides = array<i32>} : memref<32x128xf32, #tpu.memory_space<vmem>>, vector<32x128xf32>,
    return
  }
  func.func @transform_0(%arg0: i32) -> (i32, i32) {
    %c0_i32 = arith.constant 0 : i32
    %c0_i32_0 = arith.constant 0 : i32
    return %arg0, %c0_i32 : i32, i32
  }
  func.func @transform_1(%arg0: i32) -> (i32, i32) {
    %c0_i32 = arith.constant 0 : i32
    %c0_i32_0 = arith.constant 0 : i32
    %c0_i32_1 = arith.constant 0 : i32
    return %c0_i32, %c0_i32_0 : i32, i32
  }
  func.func @transform_2(%arg0: i32) -> (i32, i32) {
    %c0_i32 = arith.constant 0 : i32
    %c0_i32_0 = arith.constant 0 : i32
    %c0_i32_1 = arith.constant 0 : i32
    return %c0_i32, %c0_i32_0 : i32, i32
  }
  func.func @transform_3(%arg0: i32) -> (i32, i32) {
    %c0_i32 = arith.constant 0 : i32
    %c0_i32_0 = arith.constant 0 : i32
    %c0_i32_1 = arith.constant 0 : i32
    return %c0_i32, %c0_i32_0 : i32, i32
  }
  func.func @transform_4(%arg0: i32) -> (i32, i32) {
    %c0_i32 = arith.constant 0 : i32
    %c0_i32_0 = arith.constant 0 : i32
    %c0_i32_1 = arith.constant 0 : i32
    return %c0_i32, %c0_i32_0 : i32, i32
  }
  func.func @transform_5(%arg0: i32) -> (i32, i32) {
    %c0_i32 = arith.constant 0 : i32
    %c0_i32_0 = arith.constant 0 : i32
    %c0_i32_1 = arith.constant 0 : i32
    return %c0_i32, %c0_i32_0 : i32, i32
  }
  func.func @transform_6(%arg0: i32) -> (i32, i32) {
    %c0_i32 = arith.constant 0 : i32
    %c0_i32_0 = arith.constant 0 : i32
    %c0_i32_1 = arith.constant 0 : i32
    return %c0_i32, %c0_i32_0 : i32, i32
  }
  func.func @transform_7(%arg0: i32) -> (i32, i32) {
    %c0_i32 = arith.constant 0 : i32
    %c0_i32_0 = arith.constant 0 : i32
    return %arg0, %c0_i32 : i32, i32
  }
}

</mosaic_0001>

<llo_original>
// kernel: tpu_custom_call.1
$region0: #{tpu_custom_call.1}
  #allocation0 [shape = 'u32[]', space=smem, size = 0x4, offset = 0x4, fixed_abs, tag = 'smem constant byte address 0x4 - core index']
  #allocation1 [shape = 'u32[144,128]{1,0:T(1,128)}', space=vmem, size = 0x12000, scoped, tag = 'internal scratch']
  %s0 = inlined_call_operand.hbm [shape: f32[32,128], index: 0, kind: input, shape index: {}]
  %s1 = inlined_call_operand.vmem [shape: f32[1,128], index: 1, kind: input, shape index: {}]
  %s2 = inlined_call_operand.vmem [shape: f32[1,128], index: 2, kind: input, shape index: {}]
  %s3 = inlined_call_operand.hbm [shape: bf16[128,256], index: 3, kind: input, shape index: {}]
  %s4 = inlined_call_operand.vmem [shape: f32[1,256], index: 4, kind: input, shape index: {}]
  %s5 = inlined_call_operand.hbm [shape: bf16[256,128], index: 5, kind: input, shape index: {}]
  %s6 = inlined_call_operand.vmem [shape: f32[1,128], index: 6, kind: input, shape index: {}]
  %s7 = inlined_call_operand.hbm [shape: f32[32,128], index: 7, kind: output, shape index: {}]
  %s8 = sld [smem:[#allocation0]]
  $region50: #{tpu_custom_call.1} parent=0
    _
  %s10 = ssub.s32 1, %s8
  %s11 = scalar_select 0, %s10, %s8
  $region1: #{tpu_custom_call.1} parent=0
    #allocation2 [shape = 'u8[16384]{0}', space=vmem, size = 0x4000, scoped, tag = 'input window, operand 0, single buffered']
    #allocation3 [shape = 's32[1]{0}', space=sflag, size = 0x4, scoped, tag = 'scoped memory for tpu_custom_call.1']
    #allocation4 [shape = 's32[1]{0}', space=sflag, size = 0x4, scoped, tag = 'scoped memory for tpu_custom_call.1']
    #allocation5 [shape = 'u8[65536]{0}', space=vmem, size = 0x10000, scoped, tag = 'input window, operand 3, single buffered']
    #allocation6 [shape = 's32[1]{0}', space=sflag, size = 0x4, scoped, tag = 'scoped memory for tpu_custom_call.1']
    #allocation7 [shape = 'u8[65536]{0}', space=vmem, size = 0x10000, scoped, tag = 'input window, operand 5, single buffered']
    #allocation8 [shape = 'u8[16384]{0}', space=vmem, size = 0x4000, scoped, tag = 'output window, operand 0, single buffered']
    %12 = vsyncpa [#allocation3], 0
    %13 = vsyncpa [#allocation6], 0
    %14 = vsyncpa [#allocation4], 0
    // Predicated region
    $region2: #{tpu_custom_call.1} parent=1 // pred_check
      _
    $region3: #{tpu_custom_call.1} parent=1 // pred_check_branch
      %16 = sbr.rel (0) target = $region5
    $region4: #{tpu_custom_call.1} parent=1 // pred_region
      %s18 = ssub.s32 512, 512
      %19 = vsyncadd [#allocation3], %s18
      %s20 = sshll.u32 [#allocation2], 4
      %s21 = int_to_ptr.vmem [resolvable:$true] %s20
      %26 = dma.hbm_to_vmem [thread:$0]  %s0, 512, %s21, [#allocation3], 128, 128, 8
    $region5: #{tpu_custom_call.1} parent=1 // pred_fallthru
      _
    // Predicated region
    $region6: #{tpu_custom_call.1} parent=1 // pred_check
      _
    $region7: #{tpu_custom_call.1} parent=1 // pred_check_branch
      %28 = sbr.rel (0) target = $region9
    $region8: #{tpu_custom_call.1} parent=1 // pred_region
      _
    $region9: #{tpu_custom_call.1} parent=1 // pred_fallthru
      _
    // Predicated region
    $region10: #{tpu_custom_call.1} parent=1 // pred_check
      _
    $region11: #{tpu_custom_call.1} parent=1 // pred_check_branch
      %30 = sbr.rel (0) target = $region13
    $region12: #{tpu_custom_call.1} parent=1 // pred_region
      _
    $region13: #{tpu_custom_call.1} parent=1 // pred_fallthru
      _
    // Predicated region
    $region14: #{tpu_custom_call.1} parent=1 // pred_check
      _
    $region15: #{tpu_custom_call.1} parent=1 // pred_check_branch
      %32 = sbr.rel (0) target = $region17
    $region16: #{tpu_custom_call.1} parent=1 // pred_region
      %s34 = ssub.s32 2048, 2048
      %35 = vsyncadd [#allocation6], %s34
      %s36 = sshll.u32 [#allocation5], 4
      %s37 = int_to_ptr.vmem [resolvable:$true] %s36
      %42 = dma.hbm_to_vmem [thread:$0]  %s3, 2048, %s37, [#allocation6], 128, 128, 8
    $region17: #{tpu_custom_call.1} parent=1 // pred_fallthru
      _
    // Predicated region
    $region18: #{tpu_custom_call.1} parent=1 // pred_check
      _
    $region19: #{tpu_custom_call.1} parent=1 // pred_check_branch
      %44 = sbr.rel (0) target = $region21
    $region20: #{tpu_custom_call.1} parent=1 // pred_region
      _
    $region21: #{tpu_custom_call.1} parent=1 // pred_fallthru
      _
    // Predicated region
    $region22: #{tpu_custom_call.1} parent=1 // pred_check
      _
    $region23: #{tpu_custom_call.1} parent=1 // pred_check_branch
      %46 = sbr.rel (0) target = $region25
    $region24: #{tpu_custom_call.1} parent=1 // pred_region
      %s48 = ssub.s32 2048, 2048
      %49 = vsyncadd [#allocation6], %s48
      %s50 = sshll.u32 [#allocation7], 4
      %s51 = int_to_ptr.vmem [resolvable:$true] %s50
      %56 = dma.hbm_to_vmem [thread:$0]  %s5, 2048, %s51, [#allocation6], 64, 64, 4
    $region25: #{tpu_custom_call.1} parent=1 // pred_fallthru
      _
    // Predicated region
    $region26: #{tpu_custom_call.1} parent=1 // pred_check
      _
    $region27: #{tpu_custom_call.1} parent=1 // pred_check_branch
      %58 = sbr.rel (0) target = $region29
    $region28: #{tpu_custom_call.1} parent=1 // pred_region
      _
    $region29: #{tpu_custom_call.1} parent=1 // pred_fallthru
      _
    // Predicated region
    $region30: #{tpu_custom_call.1} parent=1 // pred_check
      _
    $region31: #{tpu_custom_call.1} parent=1 // pred_check_branch
      %60 = sbr.rel (0) target = $region33
    $region32: #{tpu_custom_call.1} parent=1 // pred_region
      %61 = dma.done [#allocation3], 512
    $region33: #{tpu_custom_call.1} parent=1 // pred_fallthru
      _
    // Predicated region
    $region34: #{tpu_custom_call.1} parent=1 // pred_check
      _
    $region35: #{tpu_custom_call.1} parent=1 // pred_check_branch
      %63 = sbr.rel (0) target = $region37
    $region36: #{tpu_custom_call.1} parent=1 // pred_region
      %64 = dma.done [#allocation6], 2048
    $region37: #{tpu_custom_call.1} parent=1 // pred_fallthru
      _
    // Predicated region
    $region38: #{tpu_custom_call.1} parent=1 // pred_check
      _
    $region39: #{tpu_custom_call.1} parent=1 // pred_check_branch
      %66 = sbr.rel (0) target = $region41
    $region40: #{tpu_custom_call.1} parent=1 // pred_region
      %67 = dma.done [#allocation6], 2048
    $region41: #{tpu_custom_call.1} parent=1 // pred_fallthru
      _
    %v69 = vld [vmem:[#allocation2] sm:$0xff]
    %v70 = vld [vmem:[#allocation2 + $0x8] sm:$0xff]
    %v71 = vld [vmem:[#allocation2 + $0x10] sm:$0xff]
    %v72 = vld [vmem:[#allocation2 + $0x18] sm:$0xff]
    %v73 = vld [vmem:[%s1] sm:$0x1]
    %v74 = vld [vmem:[%s2] sm:$0x1]
    %v75 = vld [vmem:[%s4] sm:$0x3]
    %v76 = vld [vmem:[%s6] sm:$0x1]
    %77 = vadd.xlane.f32.xlu0 %v69
    %v78 = vpop.xlane.xlu0 %77
    %79 = vadd.xlane.f32.xlu0 %v70
    %v80 = vpop.xlane.xlu0 %79
    %81 = vadd.xlane.f32.xlu0 %v71
    %v82 = vpop.xlane.xlu0 %81
    %83 = vadd.xlane.f32.xlu0 %v72
    %v84 = vpop.xlane.xlu0 %83
    %v85 = vrcp.pop 128.0
    %v86 = vmul.f32 %v78, %v85
    %v87 = vmul.f32 %v80, %v85
    %v88 = vmul.f32 %v82, %v85
    %v89 = vmul.f32 %v84, %v85
    %v90 = vsub.f32 %v69, %v86
    %v91 = vsub.f32 %v70, %v87
    %v92 = vsub.f32 %v71, %v88
    %v93 = vsub.f32 %v72, %v89
    %v94 = vmul.f32 %v90, %v90
    %v95 = vmul.f32 %v91, %v91
    %v96 = vmul.f32 %v92, %v92
    %v97 = vmul.f32 %v93, %v93
    %98 = vadd.xlane.f32.xlu0 %v94
    %v99 = vpop.xlane.xlu0 %98
    %100 = vadd.xlane.f32.xlu0 %v95
    %v101 = vpop.xlane.xlu0 %100
    %102 = vadd.xlane.f32.xlu0 %v96
    %v103 = vpop.xlane.xlu0 %102
    %104 = vadd.xlane.f32.xlu0 %v97
    %v105 = vpop.xlane.xlu0 %104
    %v106 = vmul.f32 %v99, %v85
    %v107 = vmul.f32 %v101, %v85
    %v108 = vmul.f32 %v103, %v85
    %v109 = vmul.f32 %v105, %v85
    %v110 = vadd.f32 %v106, 1e-05
    %v111 = vadd.f32 %v107, 1e-05
    %v112 = vadd.f32 %v108, 1e-05
    %v113 = vadd.f32 %v109, 1e-05
    %v114 = vrsqrt.pop %v110
    %v115 = vrsqrt.pop %v111
    %v116 = vrsqrt.pop %v112
    %v117 = vrsqrt.pop %v113
    %v118 = vmul.f32 %v90, %v114
    %v119 = vmul.f32 %v91, %v115
    %v120 = vmul.f32 %v92, %v116
    %v121 = vmul.f32 %v93, %v117
    %v123 = vlaneseq
    %v124 = vshrl.u32 %v123, 7
    %v125 = vsub.s32 0, %v124
    %v126 = vrot.slane %v73, %v125
    %v128 = vmul.f32 %v118, %v126
    %v129 = vmul.f32 %v119, %v126
    %v130 = vmul.f32 %v120, %v126
    %v131 = vmul.f32 %v121, %v126
    %v133 = vlaneseq
    %v134 = vshrl.u32 %v133, 7
    %v135 = vsub.s32 0, %v134
    %v136 = vrot.slane %v74, %v135
    %v138 = vadd.f32 %v128, %v136
    %v139 = vadd.f32 %v129, %v136
    %v140 = vadd.f32 %v130, %v136
    %v141 = vadd.f32 %v131, %v136
    %v142 = vpack.c.bf16 %v139, %v138
    %v143 = vpack.c.bf16 %v141, %v140
    %v144 = vld [vmem:[#allocation5] sm:$0xff]
    %v145 = vld [vmem:[#allocation5 + $0x8] sm:$0xff]
    %v146 = vld [vmem:[#allocation5 + $0x10] sm:$0xff]
    %v147 = vld [vmem:[#allocation5 + $0x18] sm:$0xff]
    %v148 = vld [vmem:[#allocation5 + $0x20] sm:$0xff]
    %v149 = vld [vmem:[#allocation5 + $0x28] sm:$0xff]
    %v150 = vld [vmem:[#allocation5 + $0x30] sm:$0xff]
    %v151 = vld [vmem:[#allocation5 + $0x38] sm:$0xff]
    %v152 = vld [vmem:[#allocation5 + $0x40] sm:$0xff]
    %v153 = vld [vmem:[#allocation5 + $0x48] sm:$0xff]
    %v154 = vld [vmem:[#allocation5 + $0x50] sm:$0xff]
    %v155 = vld [vmem:[#allocation5 + $0x58] sm:$0xff]
    %v156 = vld [vmem:[#allocation5 + $0x60] sm:$0xff]
    %v157 = vld [vmem:[#allocation5 + $0x68] sm:$0xff]
    %v158 = vld [vmem:[#allocation5 + $0x70] sm:$0xff]
    %v159 = vld [vmem:[#allocation5 + $0x78] sm:$0xff]
    %v161 = vlaneseq
    %v162 = vshrl.u32 %v161, 7
    %v163 = vsub.s32 0, %v162
    %v164 = vrot.slane %v75, %v163
    %v165 = vlaneseq
    %v166 = vshrl.u32 %v165, 7
    %v167 = vsub.s32 1, %v166
    %v168 = vrot.slane %v75, %v167
    %v187 = vunpack.c.l.b16 %v144
    %v188 = vunpack.c.h.b16 %v144
    %v189 = vunpack.c.l.b16 %v145
    %v190 = vunpack.c.h.b16 %v145
    %v191 = vunpack.c.l.b16 %v146
    %v192 = vunpack.c.h.b16 %v146
    %v193 = vunpack.c.l.b16 %v147
    %v194 = vunpack.c.h.b16 %v147
    %v195 = vunpack.c.l.b16 %v148
    %v196 = vunpack.c.h.b16 %v148
    %v197 = vunpack.c.l.b16 %v149
    %v198 = vunpack.c.h.b16 %v149
    %v199 = vunpack.c.l.b16 %v150
    %v200 = vunpack.c.h.b16 %v150
    %v201 = vunpack.c.l.b16 %v151
    %v202 = vunpack.c.h.b16 %v151
    %v203 = vunpack.c.l.b16 %v152
    %v204 = vunpack.c.h.b16 %v152
    %v205 = vunpack.c.l.b16 %v153
    %v206 = vunpack.c.h.b16 %v153
    %v207 = vunpack.c.l.b16 %v154
    %v208 = vunpack.c.h.b16 %v154
    %v209 = vunpack.c.l.b16 %v155
    %v210 = vunpack.c.h.b16 %v155
    %v211 = vunpack.c.l.b16 %v156
    %v212 = vunpack.c.h.b16 %v156
    %v213 = vunpack.c.l.b16 %v157
    %v214 = vunpack.c.h.b16 %v157
    %v215 = vunpack.c.l.b16 %v158
    %v216 = vunpack.c.h.b16 %v158
    %v217 = vunpack.c.l.b16 %v159
    %v218 = vunpack.c.h.b16 %v159
    %v219 = vpack.c.b16 %v189, %v187
    %v220 = vpack.c.b16 %v190, %v188
    %v221 = vpack.c.b16 %v193, %v191
    %v222 = vpack.c.b16 %v194, %v192
    %v223 = vpack.c.b16 %v197, %v195
    %v224 = vpack.c.b16 %v198, %v196
    %v225 = vpack.c.b16 %v201, %v199
    %v226 = vpack.c.b16 %v202, %v200
    %v227 = vpack.c.b16 %v205, %v203
    %v228 = vpack.c.b16 %v206, %v204
    %v229 = vpack.c.b16 %v209, %v207
    %v230 = vpack.c.b16 %v210, %v208
    %v231 = vpack.c.b16 %v213, %v211
    %v232 = vpack.c.b16 %v214, %v212
    %v233 = vpack.c.b16 %v217, %v215
    %v234 = vpack.c.b16 %v218, %v216
    %251 = vmatprep.subr.bf16.mxu0 %v220
    %252 = vmatpush1.bf16.msra.mxu0 %v219
    %253 = vmatprep.subr.bf16.mxu0 %v222
    %254 = vmatpush1.bf16.msra.mxu0 %v221
    %255 = vmatprep.subr.bf16.mxu0 %v224
    %256 = vmatpush1.bf16.msra.mxu0 %v223
    %257 = vmatprep.subr.bf16.mxu0 %v226
    %258 = vmatpush1.bf16.msra.mxu0 %v225
    %259 = vmatprep.subr.bf16.mxu0 %v228
    %260 = vmatpush1.bf16.msra.mxu0 %v227
    %261 = vmatprep.subr.bf16.mxu0 %v230
    %262 = vmatpush1.bf16.msra.mxu0 %v229
    %263 = vmatprep.subr.bf16.mxu0 %v232
    %264 = vmatpush1.bf16.msra.mxu0 %v231
    %265 = vmatprep.subr.bf16.mxu0 %v234
    %266 = vmatpush1.bf16.msra.mxu0 %v233
    %267 = vmatprep.subr.bf16.mxu0 0
    %268 = vmatpush1.bf16.msra.mxu0 0
    %269 = vmatprep.subr.bf16.mxu0 0
    %270 = vmatpush1.bf16.msra.mxu0 0
    %271 = vmatprep.subr.bf16.mxu0 0
    %272 = vmatpush1.bf16.msra.mxu0 0
    %273 = vmatprep.subr.bf16.mxu0 0
    %274 = vmatpush1.bf16.msra.mxu0 0
    %275 = vmatprep.subr.bf16.mxu0 0
    %276 = vmatpush1.bf16.msra.mxu0 0
    %277 = vmatprep.subr.bf16.mxu0 0
    %278 = vmatpush1.bf16.msra.mxu0 0
    %279 = vmatprep.subr.bf16.mxu0 0
    %280 = vmatpush1.bf16.msra.mxu0 0
    %281 = vmatprep.subr.bf16.mxu0 0
    %282 = vmatpush1.bf16.msra.mxu0 0
    %283 = vmatprep.mubr.bf16.mxu0 0
    %284 = vmatmul.mubr.bf16.gmra.mrb[0].mxu0 %v142
    %v285 = vpop.f32.mrb[0].mxu0
    %v286 = vadd.f32 %v164, %v285
    %v287 = vpop.f32.mrb[0].mxu0
    %v288 = vadd.f32 %v168, %v287
    %v289 = vpop.f32.mrb[0].mxu0
    %v290 = vadd.f32 %v164, %v289
    %v291 = vpop.f32.mrb[0].mxu0
    %v292 = vadd.f32 %v168, %v291
    %293 = vmatprep.mubr.bf16.mxu0 0
    %294 = vmatmul.mubr.bf16.gmra.mrb[0].mxu0 %v143
    %v295 = vpop.f32.mrb[0].mxu0
    %v296 = vadd.f32 %v164, %v295
    %v297 = vpop.f32.mrb[0].mxu0
    %v298 = vadd.f32 %v168, %v297
    %v299 = vpop.f32.mrb[0].mxu0
    %v300 = vadd.f32 %v164, %v299
    %v301 = vpop.f32.mrb[0].mxu0
    %v302 = vadd.f32 %v168, %v301
    %303 = vdwg.mxu0
    %v304 = vmul.f32 %v286, %v286
    %v305 = vmul.f32 %v288, %v288
    %v306 = vmul.f32 %v290, %v290
    %v307 = vmul.f32 %v292, %v292
    %v308 = vmul.f32 %v296, %v296
    %v309 = vmul.f32 %v298, %v298
    %v310 = vmul.f32 %v300, %v300
    %v311 = vmul.f32 %v302, %v302
    %v312 = vmul.f32 %v286, %v304
    %v313 = vmul.f32 %v288, %v305
    %v314 = vmul.f32 %v290, %v306
    %v315 = vmul.f32 %v292, %v307
    %v316 = vmul.f32 %v296, %v308
    %v317 = vmul.f32 %v298, %v309
    %v318 = vmul.f32 %v300, %v310
    %v319 = vmul.f32 %v302, %v311
    %v320 = vmul.f32 %v312, 0.044715
    %v321 = vmul.f32 %v313, 0.044715
    %v322 = vmul.f32 %v314, 0.044715
    %v323 = vmul.f32 %v315, 0.044715
    %v324 = vmul.f32 %v316, 0.044715
    %v325 = vmul.f32 %v317, 0.044715
    %v326 = vmul.f32 %v318, 0.044715
    %v327 = vmul.f32 %v319, 0.044715
    %v328 = vadd.f32 %v286, %v320
    %v329 = vadd.f32 %v288, %v321
    %v330 = vadd.f32 %v290, %v322
    %v331 = vadd.f32 %v292, %v323
    %v332 = vadd.f32 %v296, %v324
    %v333 = vadd.f32 %v298, %v325
    %v334 = vadd.f32 %v300, %v326
    %v335 = vadd.f32 %v302, %v327
    %v336 = vmul.f32 %v328, 0.7978846
    %v337 = vmul.f32 %v329, 0.7978846
    %v338 = vmul.f32 %v330, 0.7978846
    %v339 = vmul.f32 %v331, 0.7978846
    %v340 = vmul.f32 %v332, 0.7978846
    %v341 = vmul.f32 %v333, 0.7978846
    %v342 = vmul.f32 %v334, 0.7978846
    %v343 = vmul.f32 %v335, 0.7978846
    %v344 = vtanh.pop %v336
    %v345 = vtanh.pop %v337
    %v346 = vtanh.pop %v338
    %v347 = vtanh.pop %v339
    %v348 = vtanh.pop %v340
    %v349 = vtanh.pop %v341
    %v350 = vtanh.pop %v342
    %v351 = vtanh.pop %v343
    %v352 = vadd.f32 %v344, 1.0
    %v353 = vadd.f32 %v345, 1.0
    %v354 = vadd.f32 %v346, 1.0
    %v355 = vadd.f32 %v347, 1.0
    %v356 = vadd.f32 %v348, 1.0
    %v357 = vadd.f32 %v349, 1.0
    %v358 = vadd.f32 %v350, 1.0
    %v359 = vadd.f32 %v351, 1.0
    %v360 = vmul.f32 %v352, 0.5
    %v361 = vmul.f32 %v353, 0.5
    %v362 = vmul.f32 %v354, 0.5
    %v363 = vmul.f32 %v355, 0.5
    %v364 = vmul.f32 %v356, 0.5
    %v365 = vmul.f32 %v357, 0.5
    %v366 = vmul.f32 %v358, 0.5
    %v367 = vmul.f32 %v359, 0.5
    %v368 = vmul.f32 %v286, %v360
    %v369 = vmul.f32 %v288, %v361
    %v370 = vmul.f32 %v290, %v362
    %v371 = vmul.f32 %v292, %v363
    %v372 = vmul.f32 %v296, %v364
    %v373 = vmul.f32 %v298, %v365
    %v374 = vmul.f32 %v300, %v366
    %v375 = vmul.f32 %v302, %v367
    %v376 = vpack.c.bf16 %v370, %v368
    %v377 = vpack.c.bf16 %v371, %v369
    %v378 = vpack.c.bf16 %v374, %v372
    %v379 = vpack.c.bf16 %v375, %v373
    %v380 = vld [vmem:[#allocation7] sm:$0xf]
    %v381 = vld [vmem:[#allocation7 + $0x4] sm:$0xf]
    %v382 = vld [vmem:[#allocation7 + $0x8] sm:$0xf]
    %v383 = vld [vmem:[#allocation7 + $0xc] sm:$0xf]
    %v384 = vld [vmem:[#allocation7 + $0x10] sm:$0xf]
    %v385 = vld [vmem:[#allocation7 + $0x14] sm:$0xf]
    %v386 = vld [vmem:[#allocation7 + $0x18] sm:$0xf]
    %v387 = vld [vmem:[#allocation7 + $0x1c] sm:$0xf]
    %v388 = vld [vmem:[#allocation7 + $0x20] sm:$0xf]
    %v389 = vld [vmem:[#allocation7 + $0x24] sm:$0xf]
    %v390 = vld [vmem:[#allocation7 + $0x28] sm:$0xf]
    %v391 = vld [vmem:[#allocation7 + $0x2c] sm:$0xf]
    %v392 = vld [vmem:[#allocation7 + $0x30] sm:$0xf]
    %v393 = vld [vmem:[#allocation7 + $0x34] sm:$0xf]
    %v394 = vld [vmem:[#allocation7 + $0x38] sm:$0xf]
    %v395 = vld [vmem:[#allocation7 + $0x3c] sm:$0xf]
    %v396 = vld [vmem:[#allocation7 + $0x40] sm:$0xf]
    %v397 = vld [vmem:[#allocation7 + $0x44] sm:$0xf]
    %v398 = vld [vmem:[#allocation7 + $0x48] sm:$0xf]
    %v399 = vld [vmem:[#allocation7 + $0x4c] sm:$0xf]
    %v400 = vld [vmem:[#allocation7 + $0x50] sm:$0xf]
    %v401 = vld [vmem:[#allocation7 + $0x54] sm:$0xf]
    %v402 = vld [vmem:[#allocation7 + $0x58] sm:$0xf]
    %v403 = vld [vmem:[#allocation7 + $0x5c] sm:$0xf]
    %v404 = vld [vmem:[#allocation7 + $0x60] sm:$0xf]
    %v405 = vld [vmem:[#allocation7 + $0x64] sm:$0xf]
    %v406 = vld [vmem:[#allocation7 + $0x68] sm:$0xf]
    %v407 = vld [vmem:[#allocation7 + $0x6c] sm:$0xf]
    %v408 = vld [vmem:[#allocation7 + $0x70] sm:$0xf]
    %v409 = vld [vmem:[#allocation7 + $0x74] sm:$0xf]
    %v410 = vld [vmem:[#allocation7 + $0x78] sm:$0xf]
    %v411 = vld [vmem:[#allocation7 + $0x7c] sm:$0xf]
    %v413 = vlaneseq
    %v414 = vshrl.u32 %v413, 7
    %v415 = vsub.s32 0, %v414
    %v416 = vrot.slane %v76, %v415
    %v450 = vunpack.c.l.b16 %v380
    %v451 = vunpack.c.l.b16 %v381
    %v452 = vunpack.c.l.b16 %v382
    %v453 = vunpack.c.l.b16 %v383
    %v454 = vunpack.c.l.b16 %v384
    %v455 = vunpack.c.l.b16 %v385
    %v456 = vunpack.c.l.b16 %v386
    %v457 = vunpack.c.l.b16 %v387
    %v458 = vunpack.c.l.b16 %v388
    %v459 = vunpack.c.l.b16 %v389
    %v460 = vunpack.c.l.b16 %v390
    %v461 = vunpack.c.l.b16 %v391
    %v462 = vunpack.c.l.b16 %v392
    %v463 = vunpack.c.l.b16 %v393
    %v464 = vunpack.c.l.b16 %v394
    %v465 = vunpack.c.l.b16 %v395
    %v466 = vunpack.c.l.b16 %v396
    %v467 = vunpack.c.l.b16 %v397
    %v468 = vunpack.c.l.b16 %v398
    %v469 = vunpack.c.l.b16 %v399
    %v470 = vunpack.c.l.b16 %v400
    %v471 = vunpack.c.l.b16 %v401
    %v472 = vunpack.c.l.b16 %v402
    %v473 = vunpack.c.l.b16 %v403
    %v474 = vunpack.c.l.b16 %v404
    %v475 = vunpack.c.l.b16 %v405
    %v476 = vunpack.c.l.b16 %v406
    %v477 = vunpack.c.l.b16 %v407
    %v478 = vunpack.c.l.b16 %v408
    %v479 = vunpack.c.l.b16 %v409
    %v480 = vunpack.c.l.b16 %v410
    %v481 = vunpack.c.l.b16 %v411
    %v482 = vpack.c.b16 %v451, %v450
    %v483 = vpack.c.b16 %v453, %v452
    %v484 = vpack.c.b16 %v455, %v454
    %v485 = vpack.c.b16 %v457, %v456
    %v486 = vpack.c.b16 %v459, %v458
    %v487 = vpack.c.b16 %v461, %v460
    %v488 = vpack.c.b16 %v463, %v462
    %v489 = vpack.c.b16 %v465, %v464
    %v490 = vpack.c.b16 %v467, %v466
    %v491 = vpack.c.b16 %v469, %v468
    %v492 = vpack.c.b16 %v471, %v470
    %v493 = vpack.c.b16 %v473, %v472
    %v494 = vpack.c.b16 %v475, %v474
    %v495 = vpack.c.b16 %v477, %v476
    %v496 = vpack.c.b16 %v479, %v478
    %v497 = vpack.c.b16 %v481, %v480
    %514 = vmatprep.subr.bf16.mxu0 0
    %515 = vmatpush1.bf16.msra.mxu0 %v482
    %516 = vmatprep.subr.bf16.mxu0 0
    %517 = vmatpush1.bf16.msra.mxu0 %v483
    %518 = vmatprep.subr.bf16.mxu0 0
    %519 = vmatpush1.bf16.msra.mxu0 %v484
    %520 = vmatprep.subr.bf16.mxu0 0
    %521 = vmatpush1.bf16.msra.mxu0 %v485
    %522 = vmatprep.subr.bf16.mxu0 0
    %523 = vmatpush1.bf16.msra.mxu0 %v486
    %524 = vmatprep.subr.bf16.mxu0 0
    %525 = vmatpush1.bf16.msra.mxu0 %v487
    %526 = vmatprep.subr.bf16.mxu0 0
    %527 = vmatpush1.bf16.msra.mxu0 %v488
    %528 = vmatprep.subr.bf16.mxu0 0
    %529 = vmatpush1.bf16.msra.mxu0 %v489
    %530 = vmatprep.subr.bf16.mxu0 0
    %531 = vmatpush1.bf16.msra.mxu0 %v490
    %532 = vmatprep.subr.bf16.mxu0 0
    %533 = vmatpush1.bf16.msra.mxu0 %v491
    %534 = vmatprep.subr.bf16.mxu0 0
    %535 = vmatpush1.bf16.msra.mxu0 %v492
    %536 = vmatprep.subr.bf16.mxu0 0
    %537 = vmatpush1.bf16.msra.mxu0 %v493
    %538 = vmatprep.subr.bf16.mxu0 0
    %539 = vmatpush1.bf16.msra.mxu0 %v494
    %540 = vmatprep.subr.bf16.mxu0 0
    %541 = vmatpush1.bf16.msra.mxu0 %v495
    %542 = vmatprep.subr.bf16.mxu0 0
    %543 = vmatpush1.bf16.msra.mxu0 %v496
    %544 = vmatprep.subr.bf16.mxu0 0
    %545 = vmatpush1.bf16.msra.mxu0 %v497
    %546 = vmatprep.mubr.bf16.mxu0 %v377
    %547 = vmatmul.mubr.bf16.gmra.mrb[0].mxu0 %v376
    %v548 = vpop.f32.mrb[0].mxu0
    %v549 = vadd.f32 %v416, %v548
    %v550 = vpop.f32.mrb[0].mxu0
    %v551 = vpop.f32.mrb[0].mxu0
    %v552 = vadd.f32 %v416, %v551
    %v553 = vpop.f32.mrb[0].mxu0
    %554 = vmatprep.mubr.bf16.mxu0 %v379
    %555 = vmatmul.mubr.bf16.gmra.mrb[0].mxu0 %v378
    %v556 = vpop.f32.mrb[0].mxu0
    %v557 = vadd.f32 %v416, %v556
    %v558 = vpop.f32.mrb[0].mxu0
    %v559 = vpop.f32.mrb[0].mxu0
    %v560 = vadd.f32 %v416, %v559
    %v561 = vpop.f32.mrb[0].mxu0
    %562 = vdwg.mxu0
    %v563 = vadd.f32 %v549, %v69
    %v564 = vadd.f32 %v552, %v70
    %v565 = vadd.f32 %v557, %v71
    %v566 = vadd.f32 %v560, %v72
    %567 = vst [vmem:[#allocation8] sm:$0xff] %v563
    %568 = vst [vmem:[#allocation8 + $0x8] sm:$0xff] %v564
    %569 = vst [vmem:[#allocation8 + $0x10] sm:$0xff] %v565
    %570 = vst [vmem:[#allocation8 + $0x18] sm:$0xff] %v566
    // Predicated region
    $region42: #{tpu_custom_call.1} parent=1 // pred_check
      _
    $region43: #{tpu_custom_call.1} parent=1 // pred_check_branch
      %572 = sbr.rel (0) target = $region45
    $region44: #{tpu_custom_call.1} parent=1 // pred_region
      %s574 = ssub.s32 512, 512
      %575 = vsyncadd [#allocation4], %s574
      %s576 = sshll.u32 [#allocation8], 4
      %s577 = int_to_ptr.vmem [resolvable:$true] %s576
      %582 = dma.vmem_to_hbm [thread:$0]  %s577, 512, %s7, [#allocation4], 128, 128, 8
    $region45: #{tpu_custom_call.1} parent=1 // pred_fallthru
      _
    // Predicated region
    $region46: #{tpu_custom_call.1} parent=1 // pred_check
      _
    $region47: #{tpu_custom_call.1} parent=1 // pred_check_branch
      %584 = sbr.rel (0) target = $region49
    $region48: #{tpu_custom_call.1} parent=1 // pred_region
      %585 = dma.done [#allocation4], 512
    $region49: #{tpu_custom_call.1} parent=1 // pred_fallthru
      _
    %586 = vsyncpa [#allocation3], 1
    %587 = vsyncpa [#allocation6], 1
    %588 = vsyncpa [#allocation4], 1

</llo_original>
